<compile_context>
chip_gen: v6e
topology: v6e:2x2x1
jax: 0.10.0
libtpu: 0.0.40
codegen_flags: <defaults>
</compile_context>

<pallas_src>
import functools
from math import sqrt

import jax
import jax.numpy as jnp
from jax import lax
from jax.experimental import pallas as pl
from jax.experimental.pallas import tpu as pltpu


def _derive_vmem_limit():
    """Scoped-VMEM limit derived from the actual chip (~2/3 of physical),
    capped so v7x (64 MiB physical) keeps headroom for compiler scratch."""
    try:
        cap = int(pltpu.get_tpu_info().vmem_capacity_bytes)
    except Exception:
        cap = 64 * 1024 * 1024
    if cap < 32 * 1024 * 1024:
        cap = 64 * 1024 * 1024
    return min(int(cap * 0.65), 100 * 1024 * 1024)


_VMEM_LIMIT = _derive_vmem_limit()
_MAX_FUSED_LN_N = 4096          # fuse add+LN into the GEMM flush up to this N


def _pick_tile(dim, target, align):
    """Largest tile <= target that divides `dim` and is a multiple of `align`
    (falls back to the full dim, which is always a legal block)."""
    if dim <= target:
        return dim
    t = (target // align) * align
    while t >= align:
        if dim % t == 0:
            return t
        t -= align
    return dim


# ---------------------------------------------------------------------------
# Tiled GEMM: y = activation(x @ w_t + b)
# ---------------------------------------------------------------------------
def _matmul_kernel(x_ref, w_ref, b_ref, o_ref, acc_ref, *, activation):
    @pl.when(pl.program_id(2) == 0)
    def _init():
        # bias folded into the accumulator init -> no extra VPU add in flush
        acc_ref[...] = jnp.broadcast_to(b_ref[...], acc_ref.shape)

    acc_ref[...] += jnp.dot(x_ref[...], w_ref[...],
                            preferred_element_type=jnp.float32)

    @pl.when(pl.program_id(2) == pl.num_programs(2) - 1)
    def _flush():
        y = acc_ref[...]
        if activation == "relu":
            y = jnp.maximum(y, 0.0)
        o_ref[...] = y.astype(o_ref.dtype)


def pallas_matmul(x, w_t, b, *, activation=None, compute_dtype=jnp.bfloat16,
                  out_dtype=None, tm=512, tn=512, tk=512):
    """x: (M, K); w_t: (K, N) (weight pre-transposed, ideally pre-cast); b: (N,)."""
    M, K = x.shape
    K2, N = w_t.shape
    assert K == K2
    if out_dtype is None:
        out_dtype = compute_dtype
    m_align = 16 if jnp.dtype(compute_dtype).itemsize == 2 else 8
    tm = _pick_tile(M, tm, m_align)
    tn = _pick_tile(N, tn, 128)
    tk = _pick_tile(K, tk, 128)
    grid = (M // tm, N // tn, K // tk)

    if x.dtype != compute_dtype:            # no-op when chained in bf16
        x = x.astype(compute_dtype)
    if w_t.dtype != compute_dtype:          # no-op: weights pre-cast in __init__
        w_t = w_t.astype(compute_dtype)
    b = jnp.asarray(b, jnp.float32).reshape(1, N)

    itemsize = jnp.dtype(compute_dtype).itemsize
    cost = pl.CostEstimate(
        flops=int(2 * M * N * K), transcendentals=0,
        bytes_accessed=int((M * K + K * N) * itemsize
                           + M * N * jnp.dtype(out_dtype).itemsize + N * 4))

    return pl.pallas_call(
        functools.partial(_matmul_kernel, activation=activation),
        grid=grid,
        in_specs=[
            pl.BlockSpec((tm, tk), lambda i, j, k: (i, k)),
            pl.BlockSpec((tk, tn), lambda i, j, k: (k, j)),
            pl.BlockSpec((1, tn), lambda i, j, k: (0, j)),
        ],
        out_specs=pl.BlockSpec((tm, tn), lambda i, j, k: (i, j)),
        out_shape=jax.ShapeDtypeStruct((M, N), out_dtype),
        scratch_shapes=[pltpu.VMEM((tm, tn), jnp.float32)],
        compiler_params=pltpu.CompilerParams(
            dimension_semantics=("parallel", "parallel", "arbitrary"),
            vmem_limit_bytes=_VMEM_LIMIT),
        cost_estimate=cost,
    )(x, w_t, b)


# ---------------------------------------------------------------------------
# GEMM with fused residual-add + LayerNorm epilogue:
#   out = LayerNorm(residual + x @ w_t + b) * gamma + beta
# (requires the full N row per block so the LN reduction stays in-tile)
# ---------------------------------------------------------------------------
def _matmul_ln_kernel(x_ref, w_ref, b_ref, r_ref, g_ref, bt_ref, o_ref,
                      acc_ref, *, eps):
    @pl.when(pl.program_id(1) == 0)
    def _init():
        acc_ref[...] = jnp.broadcast_to(b_ref[...], acc_ref.shape)

    acc_ref[...] += jnp.dot(x_ref[...], w_ref[...],
                            preferred_element_type=jnp.float32)

    @pl.when(pl.program_id(1) == pl.num_programs(1) - 1)
    def _flush():
        z = acc_ref[...] + r_ref[...].astype(jnp.float32)
        mean = jnp.mean(z, axis=-1, keepdims=True)
        zc = z - mean
        var = jnp.mean(zc * zc, axis=-1, keepdims=True)
        inv = lax.rsqrt(var + eps)
        o_ref[...] = (zc * inv * g_ref[...] + bt_ref[...]).astype(o_ref.dtype)


def pallas_matmul_add_layernorm(x, w_t, b, residual, gamma, beta, *, eps=1e-5,
                                compute_dtype=jnp.bfloat16, out_dtype=None,
                                tm=512, tk=512):
    M, K = x.shape
    K2, N = w_t.shape
    assert K == K2 and residual.shape == (M, N)
    if out_dtype is None:
        out_dtype = compute_dtype
    m_align = 16 if jnp.dtype(compute_dtype).itemsize == 2 else 8
    tm = _pick_tile(M, tm, m_align)
    tk = _pick_tile(K, tk, 128)
    grid = (M // tm, K // tk)

    if x.dtype != compute_dtype:
        x = x.astype(compute_dtype)
    if w_t.dtype != compute_dtype:
        w_t = w_t.astype(compute_dtype)
    b = jnp.asarray(b, jnp.float32).reshape(1, N)
    gamma = jnp.asarray(gamma, jnp.float32).reshape(1, N)
    beta = jnp.asarray(beta, jnp.float32).reshape(1, N)

    itemsize = jnp.dtype(compute_dtype).itemsize
    cost = pl.CostEstimate(
        flops=int(2 * M * N * K + 8 * M * N), transcendentals=0,
        bytes_accessed=int((M * K + K * N) * itemsize
                           + M * N * (jnp.dtype(residual.dtype).itemsize
                                      + jnp.dtype(out_dtype).itemsize)
                           + 3 * N * 4))

    return pl.pallas_call(
        functools.partial(_matmul_ln_kernel, eps=eps),
        grid=grid,
        in_specs=[
            pl.BlockSpec((tm, tk), lambda i, k: (i, k)),
            pl.BlockSpec((tk, N), lambda i, k: (k, 0)),
            pl.BlockSpec((1, N), lambda i, k: (0, 0)),
            pl.BlockSpec((tm, N), lambda i, k: (i, 0)),
            pl.BlockSpec((1, N), lambda i, k: (0, 0)),
            pl.BlockSpec((1, N), lambda i, k: (0, 0)),
        ],
        out_specs=pl.BlockSpec((tm, N), lambda i, k: (i, 0)),
        out_shape=jax.ShapeDtypeStruct((M, N), out_dtype),
        scratch_shapes=[pltpu.VMEM((tm, N), jnp.float32)],
        compiler_params=pltpu.CompilerParams(
            dimension_semantics=("parallel", "arbitrary"),
            vmem_limit_bytes=_VMEM_LIMIT),
        cost_estimate=cost,
    )(x, w_t, b, residual, gamma, beta)


# ---------------------------------------------------------------------------
# Stand-alone fused residual add + LayerNorm (fallback when N too large to
# fuse into the GEMM epilogue)
# ---------------------------------------------------------------------------
def _add_layernorm_kernel(x_ref, y_ref, g_ref, b_ref, o_ref, *, eps):
    z = x_ref[...].astype(jnp.float32) + y_ref[...].astype(jnp.float32)
    mean = jnp.mean(z, axis=-1, keepdims=True)
    zc = z - mean
    var = jnp.mean(zc * zc, axis=-1, keepdims=True)
    inv = lax.rsqrt(var + eps)
    o_ref[...] = (zc * inv * g_ref[...] + b_ref[...]).astype(o_ref.dtype)


def pallas_add_layernorm(x, y, gamma, beta, *, eps=1e-5, tm=1024,
                         out_dtype=jnp.float32):
    M, E = x.shape
    tm = _pick_tile(M, tm, 8)
    return pl.pallas_call(
        functools.partial(_add_layernorm_kernel, eps=eps),
        grid=(M // tm,),
        in_specs=[
            pl.BlockSpec((tm, E), lambda i: (i, 0)),
            pl.BlockSpec((tm, E), lambda i: (i, 0)),
            pl.BlockSpec((1, E), lambda i: (0, 0)),
            pl.BlockSpec((1, E), lambda i: (0, 0)),
        ],
        out_specs=pl.BlockSpec((tm, E), lambda i: (i, 0)),
        out_shape=jax.ShapeDtypeStruct((M, E), out_dtype),
        compiler_params=pltpu.CompilerParams(
            dimension_semantics=("parallel",),
            vmem_limit_bytes=_VMEM_LIMIT),
    )(x, y, jnp.asarray(gamma, jnp.float32).reshape(1, E),
      jnp.asarray(beta, jnp.float32).reshape(1, E))


# ---------------------------------------------------------------------------
# Attention core: grid over (batch, head-block, query-tile)
# ---------------------------------------------------------------------------
def _pick_head_block(nh):
    """Smallest head block that is a multiple of 8 and divides nh (else nh),
    so the (head_block, head_dim) q/k/v VMEM tiles satisfy the (8,128) rule."""
    for hb in (8, 16, 24, 32, 40, 48, 56, 64):
        if hb <= nh and nh % hb == 0:
            return hb
    return nh


def _attention_l_tile(L, S, hb, hd, in_bytes, out_bytes, p_bytes, budget):
    """Pick a query tile so the per-step double-buffered working set
    (k/v + q + out + dense probs block) stays within `budget` (v7x safe)."""
    kv = 2 * 2 * S * hb * hd * in_bytes
    tl = L
    for target in (512, 256, 128, 64, 32, 16, 8):
        tl = _pick_tile(L, target, 8)
        per_q = 2 * tl * (hb * hd * (in_bytes + out_bytes) + hb * S * p_bytes)
        if kv + per_q <= budget:
            break
    return tl


def _attention_kernel(q_ref, k_ref, v_ref, o_ref, p_ref=None, *, head_block,
                      lane_dense):
    # q_ref: (tl, hb, hd); k_ref/v_ref: (S, hb, hd)
    outs = []
    for j in range(head_block):
        q = q_ref[:, j, :]                                      # (tl, hd)
        k = k_ref[:, j, :]                                      # (S, hd)
        # contract last dims of both operands -> no in-kernel transpose
        s = lax.dot_general(q, k, (((1,), (1,)), ((), ())),
                            preferred_element_type=jnp.float32)  # (tl, S)
        s = s - jnp.max(s, axis=-1, keepdims=True)               # stable softmax
        e = jnp.exp(s)                                           # f32 exp
        denom = jnp.sum(e, axis=-1, keepdims=True)
        p = e * pl.reciprocal(denom, approx=True)                # EUP slot ~free
        if p_ref is not None:
            p_ref[j] = p.astype(p_ref.dtype)
        o = jnp.dot(p.astype(v_ref.dtype), v_ref[:, j, :],
                    preferred_element_type=jnp.float32)          # (tl, hd)
        if lane_dense:
            outs.append(o)
        else:
            o_ref[:, j, :] = o.astype(o_ref.dtype)
    if lane_dense:
        # one full-lane store instead of per-head masked partial stores
        o_ref[...] = jnp.concatenate(outs, axis=-1).astype(o_ref.dtype)


def pallas_attention(q_arr, k_arr, v_arr, q_off, k_off, v_off, *,
                     compute_dtype=jnp.bfloat16, probs_dtype=jnp.float32,
                     with_probs=True):
    """q_arr: (L, B, nq_slots, nh, hd); k_arr/v_arr: (S, B, nkv_slots, nh, hd).
    *_off selects the q/k/v slot along axis 2, so heads are read straight out
    of the fused QKV projection buffer (no XLA transpose between kernels).
    Returns (attn_out (L*B, E) in compute_dtype, probs (B, nh, L, S) or None)."""
    L, B, _, nh, hd = q_arr.shape
    S = k_arr.shape[0]
    E = nh * hd

    hb = _pick_head_block(nh)
    nH = nh // hb
    in_bytes = jnp.dtype(q_arr.dtype).itemsize
    out_bytes = jnp.dtype(compute_dtype).itemsize
    p_bytes = jnp.dtype(probs_dtype).itemsize if with_probs else 0
    tl = _attention_l_tile(L, S, hb, hd, in_bytes, out_bytes, p_bytes,
                           _VMEM_LIMIT // 3)
    nL = L // tl
    # lane-dense output store only if the per-step column width is 128-aligned
    lane_dense = ((hb * hd) % 128 == 0) or (hb * hd == B * E)

    kernel = functools.partial(_attention_kernel, head_block=hb,
                               lane_dense=lane_dense)

    in_specs = [
        pl.BlockSpec((tl, pl.Squeezed(), pl.Squeezed(), hb, hd),
                     lambda b, hi, li, s=q_off: (li, b, s, hi, 0)),
        pl.BlockSpec((S, pl.Squeezed(), pl.Squeezed(), hb, hd),
                     lambda b, hi, li, s=k_off: (0, b, s, hi, 0)),
        pl.BlockSpec((S, pl.Squeezed(), pl.Squeezed(), hb, hd),
                     lambda b, hi, li, s=v_off: (0, b, s, hi, 0)),
    ]
    if lane_dense:
        out_spec_o = pl.BlockSpec((tl, hb * hd),
                                  lambda b, hi, li, n=nH: (li, b * n + hi))
        out_shape_o = jax.ShapeDtypeStruct((L, B * E), compute_dtype)
    else:
        out_spec_o = pl.BlockSpec((tl, pl.Squeezed(), hb, hd),
                                  lambda b, hi, li: (li, b, hi, 0))
        out_shape_o = jax.ShapeDtypeStruct((L, B, nh, hd), compute_dtype)

    if with_probs:
        out_specs = [out_spec_o,
                     pl.BlockSpec((pl.Squeezed(), hb, tl, S),
                                  lambda b, hi, li: (b, hi, li, 0))]
        out_shapes = (out_shape_o,
                      jax.ShapeDtypeStruct((B, nh, L, S), probs_dtype))
    else:
        out_specs = out_spec_o
        out_shapes = out_shape_o

    res = pl.pallas_call(
        kernel,
        grid=(B, nH, nL),
        in_specs=in_specs,
        out_specs=out_specs,
        out_shape=out_shapes,
        compiler_params=pltpu.CompilerParams(
            dimension_semantics=("parallel", "parallel", "parallel"),
            vmem_limit_bytes=_VMEM_LIMIT),
    )(q_arr, k_arr, v_arr)

    if with_probs:
        attn, probs = res
    else:
        attn, probs = res, None
    return attn.reshape(L * B, E), probs        # both layouts reshape for free


# ---------------------------------------------------------------------------
# Modules (parameters + glue)
# ---------------------------------------------------------------------------
class MultiheadAttenPallas:
    def __init__(self, embed_dim, num_heads, dropout=0.1, bias=True, *,
                 key, compute_dtype=jnp.bfloat16, probs_dtype=jnp.float32):
        assert embed_dim % num_heads == 0
        self.embed_dim = embed_dim
        self.num_heads = num_heads
        self.head_dim = embed_dim // num_heads
        self.dropout = dropout                  # eval mode: identity
        self.compute_dtype = compute_dtype
        self.probs_dtype = probs_dtype          # bf16 halves probs HBM traffic

        k1, k2 = jax.random.split(key)
        xav = sqrt(6.0 / (embed_dim + 3 * embed_dim))            # xavier_uniform_
        self.in_proj_weight = jax.random.uniform(
            k1, (3 * embed_dim, embed_dim), jnp.float32, -xav, xav)
        kai = 1.0 / sqrt(embed_dim)                              # kaiming(a=sqrt(5))
        self.out_proj_weight = jax.random.uniform(
            k2, (embed_dim, embed_dim), jnp.float32, -kai, kai)
        self.in_proj_bias = (jnp.zeros((3 * embed_dim,), jnp.float32)
                             if bias else None)
        self.out_proj_bias = jnp.zeros((embed_dim,), jnp.float32)

        # Kernel-friendly precomputed views: fold 1/sqrt(hd) into the q rows,
        # pre-transpose once, pre-cast once to the MXU operand dtype.
        scaling = float(self.head_dim) ** (-0.5)
        scale_rows = jnp.concatenate(
            [jnp.full((embed_dim,), scaling, jnp.float32),
             jnp.ones((2 * embed_dim,), jnp.float32)])
        b_in = (self.in_proj_bias if self.in_proj_bias is not None
                else jnp.zeros((3 * embed_dim,), jnp.float32))
        self.qkv_weight_t = ((self.in_proj_weight * scale_rows[:, None]).T
                             ).astype(compute_dtype)             # (E, 3E)
        self.qkv_bias = b_in * scale_rows                        # (3E,), f32
        self.out_weight_t = self.out_proj_weight.T.astype(compute_dtype)

    def attend(self, query, key, value, attn_mask=None, key_padding_mask=None):
        """Projection + softmax(QK^T)V, WITHOUT the output projection.
        Returns ((L*B, E) in compute_dtype, probs (B, nh, L, S))."""
        # TODO(synk): attn_mask / key_padding_mask not implemented.
        assert attn_mask is None and key_padding_mask is None
        L, B, E = query.shape
        nh, hd = self.num_heads, self.head_dim
        cdt = self.compute_dtype

        if (query is key) and (key is value):
            # self-attention: one fused GEMM against the full (E, 3E) weight
            proj = pallas_matmul(query.reshape(L * B, E), self.qkv_weight_t,
                                 self.qkv_bias, compute_dtype=cdt,
                                 out_dtype=cdt)                   # (L*B, 3E)
            qkv5 = proj.reshape(L, B, 3, nh, hd)                  # free reshape
            q_arr = k_arr = v_arr = qkv5
            offs = (0, 1, 2)
        else:
            # covers the key == value branch of the PyTorch forward
            S = key.shape[0]
            q_proj = pallas_matmul(query.reshape(L * B, E),
                                   self.qkv_weight_t[:, :E], self.qkv_bias[:E],
                                   compute_dtype=cdt, out_dtype=cdt)
            kv_proj = pallas_matmul(key.reshape(S * B, E),
                                    self.qkv_weight_t[:, E:], self.qkv_bias[E:],
                                    compute_dtype=cdt, out_dtype=cdt)
            q_arr = q_proj.reshape(L, B, 1, nh, hd)
            k_arr = v_arr = kv_proj.reshape(S, B, 2, nh, hd)
            offs = (0, 0, 1)

        return pallas_attention(q_arr, k_arr, v_arr, *offs,
                                compute_dtype=cdt,
                                probs_dtype=self.probs_dtype,
                                with_probs=True)

    def __call__(self, query, key, value, attn_mask=None, key_padding_mask=None):
        L, B, E = query.shape
        attn2d, probs = self.attend(query, key, value, attn_mask,
                                    key_padding_mask)
        out2d = pallas_matmul(attn2d, self.out_weight_t, self.out_proj_bias,
                              compute_dtype=self.compute_dtype,
                              out_dtype=jnp.float32)
        return out2d.reshape(L, B, E), probs


class TransformerEncoderLayerPallas:
    def __init__(self, hid_dim, n_heads, pf_dim=2048, dropout=0.1,
                 activation="relu", *, key, compute_dtype=jnp.bfloat16):
        assert activation == "relu"
        self.hid_dim = hid_dim
        self.pf_dim = pf_dim
        self.compute_dtype = compute_dtype
        self._fuse_ln = hid_dim <= _MAX_FUSED_LN_N
        k_attn, k_w1, k_b1, k_w2, k_b2 = jax.random.split(key, 5)

        self.self_attn = MultiheadAttenPallas(hid_dim, n_heads, dropout=dropout,
                                              key=k_attn,
                                              compute_dtype=compute_dtype)
        # Linear(hid, pf, w_init_gain='relu'): xavier_uniform(gain=sqrt(2))
        b1w = sqrt(2.0) * sqrt(6.0 / (hid_dim + pf_dim))
        w1 = jax.random.uniform(k_w1, (pf_dim, hid_dim), jnp.float32, -b1w, b1w)
        self.ff_w1_t_f32 = w1.T                                   # (hid, pf)
        self.ff_w1_t = self.ff_w1_t_f32.astype(compute_dtype)
        self.ff_b1 = jax.random.uniform(k_b1, (pf_dim,), jnp.float32,
                                        -1.0 / sqrt(hid_dim), 1.0 / sqrt(hid_dim))
        b2w = sqrt(6.0 / (hid_dim + pf_dim))
        w2 = jax.random.uniform(k_w2, (hid_dim, pf_dim), jnp.float32, -b2w, b2w)
        self.ff_w2_t_f32 = w2.T                                   # (pf, hid)
        self.ff_w2_t = self.ff_w2_t_f32.astype(compute_dtype)
        self.ff_b2 = jax.random.uniform(k_b2, (hid_dim,), jnp.float32,
                                        -1.0 / sqrt(pf_dim), 1.0 / sqrt(pf_dim))
        self.ln1_gamma = jnp.ones((hid_dim,), jnp.float32)
        self.ln1_beta = jnp.zeros((hid_dim,), jnp.float32)
        self.ln2_gamma = jnp.ones((hid_dim,), jnp.float32)
        self.ln2_beta = jnp.zeros((hid_dim,), jnp.float32)

    def __call__(self, src, src_attn_mask=None, src_key_padding_mask=None):
        # TODO(synk): dropout is eval-mode identity.
        L, B, E = src.shape
        cdt = self.compute_dtype
        src2d = src.reshape(L * B, E)

        attn2d, src_align = self.self_attn.attend(
            src, src, src, attn_mask=src_attn_mask,
            key_padding_mask=src_key_padding_mask)               # (L*B, E) cdt

        if self._fuse_ln:
            # LN1 fused into the attention output-projection GEMM epilogue
            x1 = pallas_matmul_add_layernorm(
                attn2d, self.self_attn.out_weight_t, self.self_attn.out_proj_bias,
                src2d, self.ln1_gamma, self.ln1_beta,
                compute_dtype=cdt, out_dtype=cdt)                # (L*B, E) cdt
            h = pallas_matmul(x1, self.ff_w1_t, self.ff_b1, activation="relu",
                              compute_dtype=cdt, out_dtype=cdt)  # (L*B, pf) cdt
            # LN2 fused into the FFN2 GEMM epilogue; final output in f32
            out2d = pallas_matmul_add_layernorm(
                h, self.ff_w2_t, self.ff_b2, x1, self.ln2_gamma, self.ln2_beta,
                compute_dtype=cdt, out_dtype=jnp.float32)
        else:
            attn = pallas_matmul(attn2d, self.self_attn.out_weight_t,
                                 self.self_attn.out_proj_bias,
                                 compute_dtype=cdt, out_dtype=jnp.float32)
            x1 = pallas_add_layernorm(src2d, attn, self.ln1_gamma, self.ln1_beta)
            h = pallas_matmul(x1, self.ff_w1_t, self.ff_b1, activation="relu",
                              compute_dtype=cdt, out_dtype=cdt)
            y = pallas_matmul(h, self.ff_w2_t, self.ff_b2,
                              compute_dtype=cdt, out_dtype=jnp.float32)
            out2d = pallas_add_layernorm(x1, y, self.ln2_gamma, self.ln2_beta)

        return out2d.reshape(L, B, E), src_align


# ---------------------------------------------------------------------------
# Plain-jnp reference (f32 parameters) for verification
# ---------------------------------------------------------------------------
def reference_forward(layer, src):
    m = layer.self_attn
    L, B, E = src.shape
    nh, hd = m.num_heads, m.head_dim
    scaling = float(hd) ** (-0.5)
    b_in = (m.in_proj_bias if m.in_proj_bias is not None
            else jnp.zeros((3 * E,), jnp.float32))
    proj = src @ m.in_proj_weight.T + b_in
    q, k, v = jnp.split(proj, 3, axis=-1)
    q = (q * scaling).reshape(L, B * nh, hd).transpose(1, 0, 2)
    k = k.reshape(L, B * nh, hd).transpose(1, 0, 2)
    v = v.reshape(L, B * nh, hd).transpose(1, 0, 2)
    s = jnp.einsum("bld,bsd->bls", q, k)
    p = jax.nn.softmax(s, axis=-1)
    o = jnp.einsum("bls,bsd->bld", p, v)
    o = o.transpose(1, 0, 2).reshape(L, B, E)
    attn = o @ m.out_proj_weight.T + m.out_proj_bias
    align = p.reshape(B, nh, L, L)

    def ln(x, g, bta, eps=1e-5):
        mu = jnp.mean(x, axis=-1, keepdims=True)
        xc = x - mu
        var = jnp.mean(xc * xc, axis=-1, keepdims=True)
        return xc * lax.rsqrt(var + eps) * g + bta

    x1 = ln(src + attn, layer.ln1_gamma, layer.ln1_beta)
    hdn = jnp.maximum(x1 @ layer.ff_w1_t_f32 + layer.ff_b1, 0.0)
    y2 = hdn @ layer.ff_w2_t_f32 + layer.ff_b2
    out = ln(x1 + y2, layer.ln2_gamma, layer.ln2_beta)
    return out, align


# ---------------------------------------------------------------------------
if __name__ == "__main__":
    hid_dim, n_heads, pf_dim = 128, 4, 256
    seq_len, bsz = 8, 2

    root = jax.random.PRNGKey(0)
    k_param, k_x = jax.random.split(root)
    src = jax.random.normal(k_x, (seq_len, bsz, hid_dim), jnp.float32)

    # Default bf16 MXU-operand path (f32 accumulation)
    layer = TransformerEncoderLayerPallas(hid_dim, n_heads, pf_dim=pf_dim,
                                          dropout=0.1, key=k_param)
    out, align = layer(src)
    out = jax.block_until_ready(out)
    align = jax.block_until_ready(align)

    # f32 compute path (same params, same key) for strict verification
    layer_f32 = TransformerEncoderLayerPallas(hid_dim, n_heads, pf_dim=pf_dim,
                                              dropout=0.1, key=k_param,
                                              compute_dtype=jnp.float32)
    out32, align32 = layer_f32(src)
    out32 = jax.block_until_ready(out32)
    align32 = jax.block_until_ready(align32)

    ref_out, ref_align = reference_forward(layer_f32, src)

    assert out.shape == (seq_len, bsz, hid_dim)
    assert align.shape == (bsz, n_heads, seq_len, seq_len)

    # strict check on the f32 path
    assert jnp.allclose(out32, ref_out, atol=3e-2, rtol=1e-2), \
        float(jnp.max(jnp.abs(out32 - ref_out)))
    assert jnp.allclose(align32, ref_align, atol=1e-2, rtol=1e-2), \
        float(jnp.max(jnp.abs(align32 - ref_align)))

    # sanity check on the default bf16 path
    assert jnp.all(jnp.isfinite(out))
    assert float(jnp.max(jnp.abs(out - ref_out))) < 0.35
    assert float(jnp.max(jnp.abs(align.astype(jnp.float32) - ref_align))) < 0.1

    print("KERNEL_OK")
</pallas_src>

<mosaic_0001>
module attributes {stable_mosaic.version = 11 : i64} {
  func.func @_matmul_kernel(%arg0: i32, %arg1: i32, %arg2: i32, %arg3: memref<16x128xbf16, #tpu.memory_space<vmem>>, %arg4: memref<128x384xbf16, #tpu.memory_space<vmem>>, %arg5: memref<1x384xf32, #tpu.memory_space<vmem>>, %arg6: memref<16x384xbf16, #tpu.memory_space<vmem>>, %arg7: memref<16x384xf32, #tpu.memory_space<vmem>>) attributes {dimension_semantics = [#tpu.dimension_semantics<parallel>, #tpu.dimension_semantics<parallel>, #tpu.dimension_semantics<arbitrary>], iteration_bounds = array<i64: 1, 1, 1>, scalar_prefetch = 0 : i64, scratch_operands = 1 : i64, tpu.core_type = #tpu.core_type<tc>, window_params = [{transform_indices = @transform_0, window_bounds = array<i64: 16, 128>}, {transform_indices = @transform_1, window_bounds = array<i64: 128, 384>}, {transform_indices = @transform_2, window_bounds = array<i64: 1, 384>}, {transform_indices = @transform_3, window_bounds = array<i64: 16, 384>}]} {
    %c0_i32 = arith.constant 0 : i32
    %0 = arith.cmpi eq, %arg2, %c0_i32 : i32
    %1 = arith.extui %0 : i1 to i32
    %c0_i32_0 = arith.constant 0 : i32
    %2 = arith.cmpi ne, %1, %c0_i32_0 : i32
    scf.if %2 {
      %c0_10 = arith.constant 0 : index
      %c0_11 = arith.constant 0 : index
      %12 = vector.load %arg5[%c0_10, %c0_11] : memref<1x384xf32, #tpu.memory_space<vmem>>, vector<1x384xf32>
      %13 = vector.shape_cast %12 : vector<1x384xf32> to vector<1x384xf32>
      %14 = vector.broadcast %13 : vector<1x384xf32> to vector<16x384xf32>
      %c0_12 = arith.constant 0 : index
      %c0_13 = arith.constant 0 : index
      %15 = vector.load %arg7[%c0_12, %c0_13] : memref<16x384xf32, #tpu.memory_space<vmem>>, vector<16x384xf32>
      tpu.vector_store %arg7[%c0_12, %c0_13], %14 {strides = array<i32>} : memref<16x384xf32, #tpu.memory_space<vmem>>, vector<16x384xf32>,
    } else {
    }
    %c0 = arith.constant 0 : index
    %c0_1 = arith.constant 0 : index
    %3 = vector.load %arg7[%c0, %c0_1] : memref<16x384xf32, #tpu.memory_space<vmem>>, vector<16x384xf32>
    %c0_2 = arith.constant 0 : index
    %c0_3 = arith.constant 0 : index
    %4 = vector.load %arg3[%c0_2, %c0_3] : memref<16x128xbf16, #tpu.memory_space<vmem>>, vector<16x128xbf16>
    %c0_4 = arith.constant 0 : index
    %c0_5 = arith.constant 0 : index
    %5 = vector.load %arg4[%c0_4, %c0_5] : memref<128x384xbf16, #tpu.memory_space<vmem>>, vector<128x384xbf16>
    %cst = arith.constant dense<0.000000e+00> : vector<16x384xf32>
    %6 = tpu.matmul %4, %5, %cst {dimension_numbers = #tpu.dot_dimension_numbers<[1], [0], [0], [1], [0, 0, 1, 1], [], []>} : vector<16x128xbf16>, vector<128x384xbf16>, vector<16x384xf32> -> vector<16x384xf32>
    %7 = arith.addf %3, %6 : vector<16x384xf32>
    %c0_6 = arith.constant 0 : index
    %c0_7 = arith.constant 0 : index
    %8 = vector.load %arg7[%c0_6, %c0_7] : memref<16x384xf32, #tpu.memory_space<vmem>>, vector<16x384xf32>
    tpu.vector_store %arg7[%c0_6, %c0_7], %7 {strides = array<i32>} : memref<16x384xf32, #tpu.memory_space<vmem>>, vector<16x384xf32>,
    %c0_i32_8 = arith.constant 0 : i32
    %9 = arith.cmpi eq, %arg2, %c0_i32_8 : i32
    %10 = arith.extui %9 : i1 to i32
    %c0_i32_9 = arith.constant 0 : i32
    %11 = arith.cmpi ne, %10, %c0_i32_9 : i32
    scf.if %11 {
      %c0_10 = arith.constant 0 : index
      %c0_11 = arith.constant 0 : index
      %12 = vector.load %arg7[%c0_10, %c0_11] : memref<16x384xf32, #tpu.memory_space<vmem>>, vector<16x384xf32>
      %13 = arith.truncf %12 : vector<16x384xf32> to vector<16x384xbf16>
      %c0_12 = arith.constant 0 : index
      %c0_13 = arith.constant 0 : index
      %14 = vector.load %arg6[%c0_12, %c0_13] : memref<16x384xbf16, #tpu.memory_space<vmem>>, vector<16x384xbf16>
      tpu.vector_store %arg6[%c0_12, %c0_13], %13 {strides = array<i32>} : memref<16x384xbf16, #tpu.memory_space<vmem>>, vector<16x384xbf16>,
    } else {
    }
    return
  }
  func.func @transform_0(%arg0: i32, %arg1: i32, %arg2: i32) -> (i32, i32) {
    %c0_i32 = arith.constant 0 : i32
    return %arg0, %arg2 : i32, i32
  }
  func.func @transform_1(%arg0: i32, %arg1: i32, %arg2: i32) -> (i32, i32) {
    %c0_i32 = arith.constant 0 : i32
    return %arg2, %arg1 : i32, i32
  }
  func.func @transform_2(%arg0: i32, %arg1: i32, %arg2: i32) -> (i32, i32) {
    %c0_i32 = arith.constant 0 : i32
    %c0_i32_0 = arith.constant 0 : i32
    return %c0_i32, %arg1 : i32, i32
  }
  func.func @transform_3(%arg0: i32, %arg1: i32, %arg2: i32) -> (i32, i32) {
    %c0_i32 = arith.constant 0 : i32
    return %arg0, %arg1 : i32, i32
  }
}

</mosaic_0001>

<llo_original>
// kernel: tpu_custom_call.1
$region0: #{tpu_custom_call.1}
  #allocation0 [shape = 'u32[]', space=smem, size = 0x4, offset = 0x4, fixed_abs, tag = 'smem constant byte address 0x4 - core index']
  #allocation1 [shape = 'u32[144,128]{1,0:T(1,128)}', space=vmem, size = 0x12000, scoped, tag = 'internal scratch']
  #allocation2 [shape = 'f32[16,384]{1,0:T(8,128)}', space=vmem, size = 0x6000, scoped, tag = 'scratch operand']
  %s0 = inlined_call_operand.hbm [shape: bf16[16,128], index: 0, kind: input, shape index: {}]
  %s1 = inlined_call_operand.hbm [shape: bf16[128,384], index: 1, kind: input, shape index: {}]
  %s2 = inlined_call_operand.vmem [shape: f32[1,384], index: 2, kind: input, shape index: {}]
  %s3 = inlined_call_operand.hbm [shape: bf16[16,384], index: 3, kind: output, shape index: {}]
  %s4 = sld [smem:[#allocation0]]
  $region38: #{tpu_custom_call.1} parent=0
    _
  %s6 = ssub.s32 1, %s4
  %s7 = scalar_select 0, %s6, %s4
  $region1: #{tpu_custom_call.1} parent=0
    #allocation3 [shape = 'u8[4096]{0}', space=vmem, size = 0x1000, scoped, tag = 'input window, operand 0, single buffered']
    #allocation4 [shape = 's32[1]{0}', space=sflag, size = 0x4, scoped, tag = 'scoped memory for tpu_custom_call.1']
    #allocation5 [shape = 's32[1]{0}', space=sflag, size = 0x4, scoped, tag = 'scoped memory for tpu_custom_call.1']
    #allocation6 [shape = 'u8[98304]{0}', space=vmem, size = 0x18000, scoped, tag = 'input window, operand 1, single buffered']
    #allocation7 [shape = 's32[1]{0}', space=sflag, size = 0x4, scoped, tag = 'scoped memory for tpu_custom_call.1']
    #allocation8 [shape = 'u8[12288]{0}', space=vmem, size = 0x3000, scoped, tag = 'output window, operand 0, single buffered']
    %8 = vsyncpa [#allocation4], 0
    %9 = vsyncpa [#allocation7], 0
    %10 = vsyncpa [#allocation5], 0
    // Predicated region
    $region2: #{tpu_custom_call.1} parent=1 // pred_check
      _
    $region3: #{tpu_custom_call.1} parent=1 // pred_check_branch
      %12 = sbr.rel (0) target = $region5
    $region4: #{tpu_custom_call.1} parent=1 // pred_region
      %s14 = ssub.s32 128, 128
      %15 = vsyncadd [#allocation4], %s14
      %s16 = sshll.u32 [#allocation3], 4
      %s17 = int_to_ptr.vmem [resolvable:$true] %s16
      %22 = dma.hbm_to_vmem [thread:$0]  %s0, 128, %s17, [#allocation4], 64, 64, 4
    $region5: #{tpu_custom_call.1} parent=1 // pred_fallthru
      _
    // Predicated region
    $region6: #{tpu_custom_call.1} parent=1 // pred_check
      _
    $region7: #{tpu_custom_call.1} parent=1 // pred_check_branch
      %24 = sbr.rel (0) target = $region9
    $region8: #{tpu_custom_call.1} parent=1 // pred_region
      %s26 = ssub.s32 3072, 3072
      %27 = vsyncadd [#allocation7], %s26
      %s28 = sshll.u32 [#allocation6], 4
      %s29 = int_to_ptr.vmem [resolvable:$true] %s28
      %34 = dma.hbm_to_vmem [thread:$0]  %s1, 3072, %s29, [#allocation7], 192, 192, 12
    $region9: #{tpu_custom_call.1} parent=1 // pred_fallthru
      _
    // Predicated region
    $region10: #{tpu_custom_call.1} parent=1 // pred_check
      _
    $region11: #{tpu_custom_call.1} parent=1 // pred_check_branch
      %36 = sbr.rel (0) target = $region13
    $region12: #{tpu_custom_call.1} parent=1 // pred_region
      _
    $region13: #{tpu_custom_call.1} parent=1 // pred_fallthru
      _
    // Predicated region
    $region14: #{tpu_custom_call.1} parent=1 // pred_check
      _
    $region15: #{tpu_custom_call.1} parent=1 // pred_check_branch
      %38 = sbr.rel (0) target = $region17
    $region16: #{tpu_custom_call.1} parent=1 // pred_region
      %39 = dma.done [#allocation4], 128
    $region17: #{tpu_custom_call.1} parent=1 // pred_fallthru
      _
    // Predicated region
    $region18: #{tpu_custom_call.1} parent=1 // pred_check
      _
    $region19: #{tpu_custom_call.1} parent=1 // pred_check_branch
      %41 = sbr.rel (0) target = $region21
    $region20: #{tpu_custom_call.1} parent=1 // pred_region
      %42 = dma.done [#allocation7], 3072
    $region21: #{tpu_custom_call.1} parent=1 // pred_fallthru
      _
    %p44 = scmp.eq.s32.totalorder 0, 0
    // Predicated region
    $region22: #{tpu_custom_call.1} parent=1 // pred_check
      %p45 = pneg %p44
    $region23: #{tpu_custom_call.1} parent=1 // pred_check_branch
      %47 = sbr.rel (%p45) target = $region25
    $region24: #{tpu_custom_call.1} parent=1 // pred_region
      %v48 = vld [vmem:[%s2] sm:$0x7]
      %v50 = vlaneseq
      %v51 = vshrl.u32 %v50, 7
      %v52 = vsub.s32 0, %v51
      %v53 = vrot.slane %v48, %v52
      %v54 = vlaneseq
      %v55 = vshrl.u32 %v54, 7
      %v56 = vsub.s32 1, %v55
      %v57 = vrot.slane %v48, %v56
      %v58 = vlaneseq
      %v59 = vshrl.u32 %v58, 7
      %v60 = vsub.s32 2, %v59
      %v61 = vrot.slane %v48, %v60
      %65 = vst [vmem:[#allocation2] sm:$0xff] %v53
      %66 = vst [vmem:[#allocation2 + $0x8] sm:$0xff] %v57
      %67 = vst [vmem:[#allocation2 + $0x10] sm:$0xff] %v61
      %68 = vst [vmem:[#allocation2 + $0x18] sm:$0xff] %v53
      %69 = vst [vmem:[#allocation2 + $0x20] sm:$0xff] %v57
      %70 = vst [vmem:[#allocation2 + $0x28] sm:$0xff] %v61
    $region25: #{tpu_custom_call.1} parent=1 // pred_fallthru
      _
    %v71 = vld [vmem:[#allocation2] sm:$0xff]
    %v72 = vld [vmem:[#allocation2 + $0x8] sm:$0xff]
    %v73 = vld [vmem:[#allocation2 + $0x10] sm:$0xff]
    %v74 = vld [vmem:[#allocation2 + $0x18] sm:$0xff]
    %v75 = vld [vmem:[#allocation2 + $0x20] sm:$0xff]
    %v76 = vld [vmem:[#allocation2 + $0x28] sm:$0xff]
    %v77 = vld [vmem:[#allocation3] sm:$0xf]
    %v78 = vld [vmem:[#allocation3 + $0x4] sm:$0xf]
    %v79 = vld [vmem:[#allocation6] sm:$0xff]
    %v80 = vld [vmem:[#allocation6 + $0x8] sm:$0xf]
    %v81 = vld [vmem:[#allocation6 + $0xc] sm:$0xff]
    %v82 = vld [vmem:[#allocation6 + $0x14] sm:$0xf]
    %v83 = vld [vmem:[#allocation6 + $0x18] sm:$0xff]
    %v84 = vld [vmem:[#allocation6 + $0x20] sm:$0xf]
    %v85 = vld [vmem:[#allocation6 + $0x24] sm:$0xff]
    %v86 = vld [vmem:[#allocation6 + $0x2c] sm:$0xf]
    %v87 = vld [vmem:[#allocation6 + $0x30] sm:$0xff]
    %v88 = vld [vmem:[#allocation6 + $0x38] sm:$0xf]
    %v89 = vld [vmem:[#allocation6 + $0x3c] sm:$0xff]
    %v90 = vld [vmem:[#allocation6 + $0x44] sm:$0xf]
    %v91 = vld [vmem:[#allocation6 + $0x48] sm:$0xff]
    %v92 = vld [vmem:[#allocation6 + $0x50] sm:$0xf]
    %v93 = vld [vmem:[#allocation6 + $0x54] sm:$0xff]
    %v94 = vld [vmem:[#allocation6 + $0x5c] sm:$0xf]
    %v95 = vld [vmem:[#allocation6 + $0x60] sm:$0xff]
    %v96 = vld [vmem:[#allocation6 + $0x68] sm:$0xf]
    %v97 = vld [vmem:[#allocation6 + $0x6c] sm:$0xff]
    %v98 = vld [vmem:[#allocation6 + $0x74] sm:$0xf]
    %v99 = vld [vmem:[#allocation6 + $0x78] sm:$0xff]
    %v100 = vld [vmem:[#allocation6 + $0x80] sm:$0xf]
    %v101 = vld [vmem:[#allocation6 + $0x84] sm:$0xff]
    %v102 = vld [vmem:[#allocation6 + $0x8c] sm:$0xf]
    %v103 = vld [vmem:[#allocation6 + $0x90] sm:$0xff]
    %v104 = vld [vmem:[#allocation6 + $0x98] sm:$0xf]
    %v105 = vld [vmem:[#allocation6 + $0x9c] sm:$0xff]
    %v106 = vld [vmem:[#allocation6 + $0xa4] sm:$0xf]
    %v107 = vld [vmem:[#allocation6 + $0xa8] sm:$0xff]
    %v108 = vld [vmem:[#allocation6 + $0xb0] sm:$0xf]
    %v109 = vld [vmem:[#allocation6 + $0xb4] sm:$0xff]
    %v110 = vld [vmem:[#allocation6 + $0xbc] sm:$0xf]
    %v113 = vunpack.c.l.b16 %v77
    %v114 = vunpack.c.l.b16 %v78
    %v115 = vpack.c.b16 %v114, %v113
    %v149 = vunpack.c.l.b16 %v79
    %v150 = vunpack.c.h.b16 %v79
    %v151 = vunpack.c.l.b16 %v80
    %v152 = vunpack.c.l.b16 %v81
    %v153 = vunpack.c.h.b16 %v81
    %v154 = vunpack.c.l.b16 %v82
    %v155 = vunpack.c.l.b16 %v83
    %v156 = vunpack.c.h.b16 %v83
    %v157 = vunpack.c.l.b16 %v84
    %v158 = vunpack.c.l.b16 %v85
    %v159 = vunpack.c.h.b16 %v85
    %v160 = vunpack.c.l.b16 %v86
    %v161 = vunpack.c.l.b16 %v87
    %v162 = vunpack.c.h.b16 %v87
    %v163 = vunpack.c.l.b16 %v88
    %v164 = vunpack.c.l.b16 %v89
    %v165 = vunpack.c.h.b16 %v89
    %v166 = vunpack.c.l.b16 %v90
    %v167 = vunpack.c.l.b16 %v91
    %v168 = vunpack.c.h.b16 %v91
    %v169 = vunpack.c.l.b16 %v92
    %v170 = vunpack.c.l.b16 %v93
    %v171 = vunpack.c.h.b16 %v93
    %v172 = vunpack.c.l.b16 %v94
    %v173 = vunpack.c.l.b16 %v95
    %v174 = vunpack.c.h.b16 %v95
    %v175 = vunpack.c.l.b16 %v96
    %v176 = vunpack.c.l.b16 %v97
    %v177 = vunpack.c.h.b16 %v97
    %v178 = vunpack.c.l.b16 %v98
    %v179 = vunpack.c.l.b16 %v99
    %v180 = vunpack.c.h.b16 %v99
    %v181 = vunpack.c.l.b16 %v100
    %v182 = vunpack.c.l.b16 %v101
    %v183 = vunpack.c.h.b16 %v101
    %v184 = vunpack.c.l.b16 %v102
    %v185 = vunpack.c.l.b16 %v103
    %v186 = vunpack.c.h.b16 %v103
    %v187 = vunpack.c.l.b16 %v104
    %v188 = vunpack.c.l.b16 %v105
    %v189 = vunpack.c.h.b16 %v105
    %v190 = vunpack.c.l.b16 %v106
    %v191 = vunpack.c.l.b16 %v107
    %v192 = vunpack.c.h.b16 %v107
    %v193 = vunpack.c.l.b16 %v108
    %v194 = vunpack.c.l.b16 %v109
    %v195 = vunpack.c.h.b16 %v109
    %v196 = vunpack.c.l.b16 %v110
    %v197 = vpack.c.b16 %v152, %v149
    %v198 = vpack.c.b16 %v153, %v150
    %v199 = vpack.c.b16 %v154, %v151
    %v200 = vpack.c.b16 %v158, %v155
    %v201 = vpack.c.b16 %v159, %v156
    %v202 = vpack.c.b16 %v160, %v157
    %v203 = vpack.c.b16 %v164, %v161
    %v204 = vpack.c.b16 %v165, %v162
    %v205 = vpack.c.b16 %v166, %v163
    %v206 = vpack.c.b16 %v170, %v167
    %v207 = vpack.c.b16 %v171, %v168
    %v208 = vpack.c.b16 %v172, %v169
    %v209 = vpack.c.b16 %v176, %v173
    %v210 = vpack.c.b16 %v177, %v174
    %v211 = vpack.c.b16 %v178, %v175
    %v212 = vpack.c.b16 %v182, %v179
    %v213 = vpack.c.b16 %v183, %v180
    %v214 = vpack.c.b16 %v184, %v181
    %v215 = vpack.c.b16 %v188, %v185
    %v216 = vpack.c.b16 %v189, %v186
    %v217 = vpack.c.b16 %v190, %v187
    %v218 = vpack.c.b16 %v194, %v191
    %v219 = vpack.c.b16 %v195, %v192
    %v220 = vpack.c.b16 %v196, %v193
    %245 = vmatprep.subr.bf16.mxu0 %v219
    %246 = vmatpush1.bf16.msra.mxu0 %v218
    %247 = vmatprep.subr.bf16.mxu0 %v216
    %248 = vmatpush1.bf16.msra.mxu0 %v215
    %249 = vmatprep.subr.bf16.mxu0 %v213
    %250 = vmatpush1.bf16.msra.mxu0 %v212
    %251 = vmatprep.subr.bf16.mxu0 %v210
    %252 = vmatpush1.bf16.msra.mxu0 %v209
    %253 = vmatprep.subr.bf16.mxu0 %v207
    %254 = vmatpush1.bf16.msra.mxu0 %v206
    %255 = vmatprep.subr.bf16.mxu0 %v204
    %256 = vmatpush1.bf16.msra.mxu0 %v203
    %257 = vmatprep.subr.bf16.mxu0 %v201
    %258 = vmatpush1.bf16.msra.mxu0 %v200
    %259 = vmatprep.subr.bf16.mxu0 %v198
    %260 = vmatpush1.bf16.msra.mxu0 %v197
    %261 = vmatprep.subr.bf16.mxu0 0
    %262 = vmatpush2.bf16.msra.mxu0 0
    %263 = vmatprep.subr.bf16.mxu0 0
    %264 = vmatpush2.bf16.msra.mxu0 0
    %265 = vmatprep.subr.bf16.mxu0 0
    %266 = vmatpush2.bf16.msra.mxu0 0
    %267 = vmatprep.subr.bf16.mxu0 0
    %268 = vmatpush2.bf16.msra.mxu0 0
    %269 = vmatprep.subr.bf16.mxu0 0
    %270 = vmatpush2.bf16.msra.mxu0 0
    %271 = vmatprep.subr.bf16.mxu0 0
    %272 = vmatpush2.bf16.msra.mxu0 0
    %273 = vmatprep.subr.bf16.mxu0 0
    %274 = vmatpush2.bf16.msra.mxu0 0
    %275 = vmatprep.subr.bf16.mxu0 0
    %276 = vmatpush2.bf16.msra.mxu0 0
    %277 = vmatprep.mubr.bf16.mxu0 0
    %278 = vmatmul.mubr.bf16.gmra.mxu0 %v115
    %v279 = vpop.f32.mrf.mxu0
    %v280 = vadd.f32 0.0, %v279
    %v281 = vpop.f32.mrf.mxu0
    %v282 = vadd.f32 0.0, %v281
    %v283 = vpop.f32.mrf.mxu0
    %v284 = vadd.f32 0.0, %v283
    %v285 = vpop.f32.mrf.mxu0
    %v286 = vadd.f32 0.0, %v285
    %287 = vdwg.mxu0
    %288 = vmatprep.subr.bf16.mxu0 0
    %289 = vmatpush1.bf16.msra.mxu0 %v220
    %290 = vmatprep.subr.bf16.mxu0 0
    %291 = vmatpush1.bf16.msra.mxu0 %v217
    %292 = vmatprep.subr.bf16.mxu0 0
    %293 = vmatpush1.bf16.msra.mxu0 %v214
    %294 = vmatprep.subr.bf16.mxu0 0
    %295 = vmatpush1.bf16.msra.mxu0 %v211
    %296 = vmatprep.subr.bf16.mxu0 0
    %297 = vmatpush1.bf16.msra.mxu0 %v208
    %298 = vmatprep.subr.bf16.mxu0 0
    %299 = vmatpush1.bf16.msra.mxu0 %v205
    %300 = vmatprep.subr.bf16.mxu0 0
    %301 = vmatpush1.bf16.msra.mxu0 %v202
    %302 = vmatprep.subr.bf16.mxu0 0
    %303 = vmatpush1.bf16.msra.mxu0 %v199
    %304 = vmatprep.subr.bf16.mxu0 0
    %305 = vmatpush2.bf16.msra.mxu0 0
    %306 = vmatprep.subr.bf16.mxu0 0
    %307 = vmatpush2.bf16.msra.mxu0 0
    %308 = vmatprep.subr.bf16.mxu0 0
    %309 = vmatpush2.bf16.msra.mxu0 0
    %310 = vmatprep.subr.bf16.mxu0 0
    %311 = vmatpush2.bf16.msra.mxu0 0
    %312 = vmatprep.subr.bf16.mxu0 0
    %313 = vmatpush2.bf16.msra.mxu0 0
    %314 = vmatprep.subr.bf16.mxu0 0
    %315 = vmatpush2.bf16.msra.mxu0 0
    %316 = vmatprep.subr.bf16.mxu0 0
    %317 = vmatpush2.bf16.msra.mxu0 0
    %318 = vmatprep.subr.bf16.mxu0 0
    %319 = vmatpush2.bf16.msra.mxu0 0
    %320 = vmatprep.mubr.bf16.mxu0 0
    %321 = vmatmul.mubr.bf16.gmra.mxu0 %v115
    %v322 = vpop.f32.mrf.mxu0
    %v323 = vadd.f32 0.0, %v322
    %v324 = vpop.f32.mrf.mxu0
    %v325 = vpop.f32.mrf.mxu0
    %v326 = vadd.f32 0.0, %v325
    %v327 = vpop.f32.mrf.mxu0
    %328 = vdwg.mxu0
    %v329 = vadd.f32 %v71, %v280
    %v330 = vadd.f32 %v72, %v282
    %v331 = vadd.f32 %v73, %v323
    %v332 = vadd.f32 %v74, %v284
    %v333 = vadd.f32 %v75, %v286
    %v334 = vadd.f32 %v76, %v326
    %335 = vst [vmem:[#allocation2] sm:$0xff] %v329
    %336 = vst [vmem:[#allocation2 + $0x8] sm:$0xff] %v330
    %337 = vst [vmem:[#allocation2 + $0x10] sm:$0xff] %v331
    %338 = vst [vmem:[#allocation2 + $0x18] sm:$0xff] %v332
    %339 = vst [vmem:[#allocation2 + $0x20] sm:$0xff] %v333
    %340 = vst [vmem:[#allocation2 + $0x28] sm:$0xff] %v334
    // Predicated region
    $region26: #{tpu_custom_call.1} parent=1 // pred_check
      %p341 = pneg %p44
    $region27: #{tpu_custom_call.1} parent=1 // pred_check_branch
      %343 = sbr.rel (%p341) target = $region29
    $region28: #{tpu_custom_call.1} parent=1 // pred_region
      %v344 = vld [vmem:[#allocation2] sm:$0xff]
      %v345 = vld [vmem:[#allocation2 + $0x8] sm:$0xff]
      %v346 = vld [vmem:[#allocation2 + $0x10] sm:$0xff]
      %v347 = vld [vmem:[#allocation2 + $0x18] sm:$0xff]
      %v348 = vld [vmem:[#allocation2 + $0x20] sm:$0xff]
      %v349 = vld [vmem:[#allocation2 + $0x28] sm:$0xff]
      %v350 = vpack.c.bf16 %v347, %v344
      %v351 = vpack.c.bf16 %v348, %v345
      %v352 = vpack.c.bf16 %v349, %v346
      %v356 = vunpack.c.l.b16 %v350
      %v357 = vunpack.c.l.b16 %v351
      %v358 = vunpack.c.l.b16 %v352
      %v359 = vunpack.c.h.b16 %v350
      %v360 = vunpack.c.h.b16 %v351
      %v361 = vunpack.c.h.b16 %v352
      %v362 = vpack.c.b16 %v357, %v356
      %v363 = vpack.c.b16 %v358, %v358
      %v364 = vpack.c.b16 %v360, %v359
      %v365 = vpack.c.b16 %v361, %v361
      %370 = vst [vmem:[#allocation8] sm:$0xff] %v362
      %371 = vst [vmem:[#allocation8 + $0x8] sm:$0xf] %v363
      %372 = vst [vmem:[#allocation8 + $0xc] sm:$0xff] %v364
      %373 = vst [vmem:[#allocation8 + $0x14] sm:$0xf] %v365
    $region29: #{tpu_custom_call.1} parent=1 // pred_fallthru
      _
    // Predicated region
    $region30: #{tpu_custom_call.1} parent=1 // pred_check
      _
    $region31: #{tpu_custom_call.1} parent=1 // pred_check_branch
      %375 = sbr.rel (0) target = $region33
    $region32: #{tpu_custom_call.1} parent=1 // pred_region
      %s377 = ssub.s32 384, 384
      %378 = vsyncadd [#allocation5], %s377
      %s379 = sshll.u32 [#allocation8], 4
      %s380 = int_to_ptr.vmem [resolvable:$true] %s379
      %385 = dma.vmem_to_hbm [thread:$0]  %s380, 384, %s3, [#allocation5], 192, 192, 12
    $region33: #{tpu_custom_call.1} parent=1 // pred_fallthru
      _
    // Predicated region
    $region34: #{tpu_custom_call.1} parent=1 // pred_check
      _
    $region35: #{tpu_custom_call.1} parent=1 // pred_check_branch
      %387 = sbr.rel (0) target = $region37
    $region36: #{tpu_custom_call.1} parent=1 // pred_region
      %388 = dma.done [#allocation5], 384
    $region37: #{tpu_custom_call.1} parent=1 // pred_fallthru
      _
    %389 = vsyncpa [#allocation4], 1
    %390 = vsyncpa [#allocation7], 1
    %391 = vsyncpa [#allocation5], 1

</llo_original>
